<compile_context>
chip_gen: v6e
topology: v6e:2x2x1
jax: 0.10.0
libtpu: 0.0.40
codegen_flags: <defaults>
</compile_context>

<pallas_src>
import functools

import jax
import jax.numpy as jnp
from jax.experimental import pallas as pl
from jax.experimental.pallas import tpu as pltpu


def _ff_kernel(x_ref, w1_ref, b1_ref, w2_ref, b2_ref, o_ref, acc_ref):
    k = pl.program_id(2)

    @pl.when(k == 0)
    def _init():
        # Fold the second bias into the accumulator initialization.
        acc_ref[...] = jnp.broadcast_to(b2_ref[...], acc_ref.shape)

    # First linear: (tm, Dp) @ (Dp, tk) -> f32
    h = jnp.dot(x_ref[...], w1_ref[...], preferred_element_type=jnp.float32)
    h = h + b1_ref[...]
    # ReluSquared activation (f32 epilogue).
    a = jnp.maximum(h, 0.0)
    a = a * a
    # Dropout(p=0.0) is the identity -> skipped.
    # Second linear partial product, accumulated over hidden tiles.
    acc_ref[...] += jnp.dot(a.astype(w2_ref.dtype), w2_ref[...],
                            preferred_element_type=jnp.float32)

    @pl.when(k == pl.num_programs(2) - 1)
    def _finalize():
        o_ref[...] = acc_ref[...].astype(o_ref.dtype)


def _round_up(a, b):
    return (a + b - 1) // b * b


@functools.partial(jax.jit, static_argnames=("tile_m", "tile_k", "tile_n"))
def feed_forward(x, w1, b1, w2, b2, *, tile_m=256, tile_k=512, tile_n=2048):
    """x: (M, dim). w1: (dim, hidden). w2: (hidden, out_dim). Returns (M, out_dim)."""
    M, dim = x.shape
    hidden = w1.shape[1]
    out_dim = w2.shape[1]
    compute_dtype = jnp.bfloat16  # MXU operand dtype (f32 accumulation)

    # Clamp tiles to (padded) problem sizes; keep lane dims multiples of 128.
    Dp = _round_up(dim, 128)
    tm = min(tile_m, _round_up(M, 8))
    tk = min(tile_k, _round_up(hidden, 128))
    tn = min(tile_n, _round_up(out_dim, 128))
    Mp = _round_up(M, tm)
    Hp = _round_up(hidden, tk)
    Np = _round_up(out_dim, tn)

    # Zero-pad operands (zeros in padded rows/cols keep the math exact).
    xp = jnp.zeros((Mp, Dp), compute_dtype).at[:M, :dim].set(
        x.astype(compute_dtype))
    w1p = jnp.zeros((Dp, Hp), compute_dtype).at[:dim, :hidden].set(
        w1.astype(compute_dtype))
    w2p = jnp.zeros((Hp, Np), compute_dtype).at[:hidden, :out_dim].set(
        w2.astype(compute_dtype))
    b1p = jnp.zeros((1, Hp), jnp.float32).at[0, :hidden].set(
        b1.astype(jnp.float32))
    b2p = jnp.zeros((1, Np), jnp.float32).at[0, :out_dim].set(
        b2.astype(jnp.float32))

    grid = (Mp // tm, Np // tn, Hp // tk)

    # Explicit VMEM budget: double-buffered inputs/outputs + f32 accumulator,
    # capped at 64 MiB so the same plan compiles on v7x (64 MiB physical VMEM).
    isz = jnp.dtype(compute_dtype).itemsize
    osz = jnp.dtype(x.dtype).itemsize
    est = (2 * (tm * Dp * isz + Dp * tk * isz + tk * 4
                + tk * tn * isz + tn * 4 + tm * tn * osz)
           + tm * tn * 4 + (4 << 20))
    vmem_limit = int(min(max(est, 32 << 20), 64 << 20))

    out = pl.pallas_call(
        _ff_kernel,
        out_shape=jax.ShapeDtypeStruct((Mp, Np), x.dtype),
        grid_spec=pltpu.PrefetchScalarGridSpec(
            num_scalar_prefetch=0,
            grid=grid,
            in_specs=[
                pl.BlockSpec((tm, Dp), lambda i, j, k: (i, 0)),   # x tile
                pl.BlockSpec((Dp, tk), lambda i, j, k: (0, k)),   # W1 hidden tile
                pl.BlockSpec((1, tk), lambda i, j, k: (0, k)),    # b1 tile
                pl.BlockSpec((tk, tn), lambda i, j, k: (k, j)),   # W2 tile
                pl.BlockSpec((1, tn), lambda i, j, k: (0, j)),    # b2 tile
            ],
            out_specs=pl.BlockSpec((tm, tn), lambda i, j, k: (i, j)),
            scratch_shapes=[pltpu.VMEM((tm, tn), jnp.float32)],
        ),
        compiler_params=pltpu.CompilerParams(
            dimension_semantics=("parallel", "parallel", "arbitrary"),
            vmem_limit_bytes=vmem_limit,
        ),
    )(xp, w1p, b1p, w2p, b2p)

    return out[:M, :out_dim]


def feed_forward_ref(x, w1, b1, w2, b2):
    h = x @ w1 + b1
    a = jnp.maximum(h, 0.0) ** 2
    return a @ w2 + b2


if __name__ == "__main__":
    batch, seq, dim, hidden = 2, 8, 32, 64
    output_dim = dim  # module default: output_dim = dim
    # Dropout(0.0) -> identity; activation = ReluSquared (module default).

    key = jax.random.PRNGKey(0)
    kx, kw1, kb1, kw2, kb2 = jax.random.split(key, 5)
    x = jax.random.normal(kx, (batch, seq, dim), dtype=jnp.float32)
    # Deterministic synthetic parameter init (uniform, PyTorch-Linear-like scale)
    lim1 = 1.0 / (dim ** 0.5)
    lim2 = 1.0 / (hidden ** 0.5)
    w1 = jax.random.uniform(kw1, (dim, hidden), minval=-lim1, maxval=lim1,
                            dtype=jnp.float32)
    b1 = jax.random.uniform(kb1, (hidden,), minval=-lim1, maxval=lim1,
                            dtype=jnp.float32)
    w2 = jax.random.uniform(kw2, (hidden, output_dim), minval=-lim2, maxval=lim2,
                            dtype=jnp.float32)
    b2 = jax.random.uniform(kb2, (output_dim,), minval=-lim2, maxval=lim2,
                            dtype=jnp.float32)

    x2d = x.reshape(batch * seq, dim)
    out = feed_forward(x2d, w1, b1, w2, b2)
    out = jax.block_until_ready(out)
    out3d = out.reshape(batch, seq, output_dim)

    ref = feed_forward_ref(x2d, w1, b1, w2, b2).reshape(batch, seq, output_dim)
    assert out3d.shape == (batch, seq, output_dim)
    # bf16 MXU operands (f32 accumulation) -> loosened tolerance vs f32 reference.
    assert jnp.allclose(out3d, ref, atol=3e-2, rtol=3e-2), (
        float(jnp.max(jnp.abs(out3d - ref))))
    print("KERNEL_OK")
</pallas_src>

<mosaic_0001>
module attributes {stable_mosaic.version = 11 : i64} {
  func.func @_ff_kernel(%arg0: i32, %arg1: i32, %arg2: i32, %arg3: memref<16x128xbf16, #tpu.memory_space<vmem>>, %arg4: memref<128x128xbf16, #tpu.memory_space<vmem>>, %arg5: memref<1x128xf32, #tpu.memory_space<vmem>>, %arg6: memref<128x128xbf16, #tpu.memory_space<vmem>>, %arg7: memref<1x128xf32, #tpu.memory_space<vmem>>, %arg8: memref<16x128xf32, #tpu.memory_space<vmem>>, %arg9: memref<16x128xf32, #tpu.memory_space<vmem>>) attributes {dimension_semantics = [#tpu.dimension_semantics<parallel>, #tpu.dimension_semantics<parallel>, #tpu.dimension_semantics<arbitrary>], iteration_bounds = array<i64: 1, 1, 1>, scalar_prefetch = 0 : i64, scratch_operands = 1 : i64, tpu.core_type = #tpu.core_type<tc>, window_params = [{transform_indices = @transform_0, window_bounds = array<i64: 16, 128>}, {transform_indices = @transform_1, window_bounds = array<i64: 128, 128>}, {transform_indices = @transform_2, window_bounds = array<i64: 1, 128>}, {transform_indices = @transform_3, window_bounds = array<i64: 128, 128>}, {transform_indices = @transform_4, window_bounds = array<i64: 1, 128>}, {transform_indices = @transform_5, window_bounds = array<i64: 16, 128>}]} {
    %c0_i32 = arith.constant 0 : i32
    %0 = arith.cmpi eq, %arg2, %c0_i32 : i32
    %1 = arith.extui %0 : i1 to i32
    %c0_i32_0 = arith.constant 0 : i32
    %2 = arith.cmpi ne, %1, %c0_i32_0 : i32
    scf.if %2 {
      %c0_16 = arith.constant 0 : index
      %c0_17 = arith.constant 0 : index
      %21 = vector.load %arg7[%c0_16, %c0_17] : memref<1x128xf32, #tpu.memory_space<vmem>>, vector<1x128xf32>
      %22 = vector.shape_cast %21 : vector<1x128xf32> to vector<1x128xf32>
      %23 = vector.broadcast %22 : vector<1x128xf32> to vector<16x128xf32>
      %c0_18 = arith.constant 0 : index
      %c0_19 = arith.constant 0 : index
      %24 = vector.load %arg9[%c0_18, %c0_19] : memref<16x128xf32, #tpu.memory_space<vmem>>, vector<16x128xf32>
      tpu.vector_store %arg9[%c0_18, %c0_19], %23 {strides = array<i32>} : memref<16x128xf32, #tpu.memory_space<vmem>>, vector<16x128xf32>,
    } else {
    }
    %c0 = arith.constant 0 : index
    %c0_1 = arith.constant 0 : index
    %3 = vector.load %arg3[%c0, %c0_1] : memref<16x128xbf16, #tpu.memory_space<vmem>>, vector<16x128xbf16>
    %c0_2 = arith.constant 0 : index
    %c0_3 = arith.constant 0 : index
    %4 = vector.load %arg4[%c0_2, %c0_3] : memref<128x128xbf16, #tpu.memory_space<vmem>>, vector<128x128xbf16>
    %cst = arith.constant dense<0.000000e+00> : vector<16x128xf32>
    %5 = tpu.matmul %3, %4, %cst {dimension_numbers = #tpu.dot_dimension_numbers<[1], [0], [0], [1], [0, 0, 1, 1], [], []>} : vector<16x128xbf16>, vector<128x128xbf16>, vector<16x128xf32> -> vector<16x128xf32>
    %c0_4 = arith.constant 0 : index
    %c0_5 = arith.constant 0 : index
    %6 = vector.load %arg5[%c0_4, %c0_5] : memref<1x128xf32, #tpu.memory_space<vmem>>, vector<1x128xf32>
    %7 = vector.broadcast %6 : vector<1x128xf32> to vector<16x128xf32>
    %8 = arith.addf %5, %7 : vector<16x128xf32>
    %cst_6 = arith.constant 0.000000e+00 : f32
    %9 = vector.broadcast %cst_6 : f32 to vector<16x128xf32>
    %10 = arith.maximumf %8, %9 : vector<16x128xf32>
    %11 = arith.mulf %10, %10 : vector<16x128xf32>
    %c0_7 = arith.constant 0 : index
    %c0_8 = arith.constant 0 : index
    %12 = vector.load %arg9[%c0_7, %c0_8] : memref<16x128xf32, #tpu.memory_space<vmem>>, vector<16x128xf32>
    %13 = arith.truncf %11 : vector<16x128xf32> to vector<16x128xbf16>
    %c0_9 = arith.constant 0 : index
    %c0_10 = arith.constant 0 : index
    %14 = vector.load %arg6[%c0_9, %c0_10] : memref<128x128xbf16, #tpu.memory_space<vmem>>, vector<128x128xbf16>
    %cst_11 = arith.constant dense<0.000000e+00> : vector<16x128xf32>
    %15 = tpu.matmul %13, %14, %cst_11 {dimension_numbers = #tpu.dot_dimension_numbers<[1], [0], [0], [1], [0, 0, 1, 1], [], []>} : vector<16x128xbf16>, vector<128x128xbf16>, vector<16x128xf32> -> vector<16x128xf32>
    %16 = arith.addf %12, %15 : vector<16x128xf32>
    %c0_12 = arith.constant 0 : index
    %c0_13 = arith.constant 0 : index
    %17 = vector.load %arg9[%c0_12, %c0_13] : memref<16x128xf32, #tpu.memory_space<vmem>>, vector<16x128xf32>
    tpu.vector_store %arg9[%c0_12, %c0_13], %16 {strides = array<i32>} : memref<16x128xf32, #tpu.memory_space<vmem>>, vector<16x128xf32>,
    %c0_i32_14 = arith.constant 0 : i32
    %18 = arith.cmpi eq, %arg2, %c0_i32_14 : i32
    %19 = arith.extui %18 : i1 to i32
    %c0_i32_15 = arith.constant 0 : i32
    %20 = arith.cmpi ne, %19, %c0_i32_15 : i32
    scf.if %20 {
      %c0_16 = arith.constant 0 : index
      %c0_17 = arith.constant 0 : index
      %21 = vector.load %arg9[%c0_16, %c0_17] : memref<16x128xf32, #tpu.memory_space<vmem>>, vector<16x128xf32>
      %c0_18 = arith.constant 0 : index
      %c0_19 = arith.constant 0 : index
      %22 = vector.load %arg8[%c0_18, %c0_19] : memref<16x128xf32, #tpu.memory_space<vmem>>, vector<16x128xf32>
      tpu.vector_store %arg8[%c0_18, %c0_19], %21 {strides = array<i32>} : memref<16x128xf32, #tpu.memory_space<vmem>>, vector<16x128xf32>,
    } else {
    }
    return
  }
  func.func @transform_0(%arg0: i32, %arg1: i32, %arg2: i32) -> (i32, i32) {
    %c0_i32 = arith.constant 0 : i32
    %c0_i32_0 = arith.constant 0 : i32
    return %arg0, %c0_i32 : i32, i32
  }
  func.func @transform_1(%arg0: i32, %arg1: i32, %arg2: i32) -> (i32, i32) {
    %c0_i32 = arith.constant 0 : i32
    %c0_i32_0 = arith.constant 0 : i32
    return %c0_i32, %arg2 : i32, i32
  }
  func.func @transform_2(%arg0: i32, %arg1: i32, %arg2: i32) -> (i32, i32) {
    %c0_i32 = arith.constant 0 : i32
    %c0_i32_0 = arith.constant 0 : i32
    return %c0_i32, %arg2 : i32, i32
  }
  func.func @transform_3(%arg0: i32, %arg1: i32, %arg2: i32) -> (i32, i32) {
    %c0_i32 = arith.constant 0 : i32
    return %arg2, %arg1 : i32, i32
  }
  func.func @transform_4(%arg0: i32, %arg1: i32, %arg2: i32) -> (i32, i32) {
    %c0_i32 = arith.constant 0 : i32
    %c0_i32_0 = arith.constant 0 : i32
    return %c0_i32, %arg1 : i32, i32
  }
  func.func @transform_5(%arg0: i32, %arg1: i32, %arg2: i32) -> (i32, i32) {
    %c0_i32 = arith.constant 0 : i32
    return %arg0, %arg1 : i32, i32
  }
}

</mosaic_0001>

<llo_original>
// kernel: feed_forward.1
$region0: #{feed_forward.1}
  #allocation0 [shape = 'u32[]', space=smem, size = 0x4, offset = 0x4, fixed_abs, tag = 'smem constant byte address 0x4 - core index']
  #allocation1 [shape = 'u32[144,128]{1,0:T(1,128)}', space=vmem, size = 0x12000, scoped, tag = 'internal scratch']
  #allocation2 [shape = 'f32[16,128]{1,0:T(8,128)}', space=vmem, size = 0x2000, scoped, tag = 'scratch operand']
  %s0 = inlined_call_operand.vmem [shape: bf16[16,128], index: 0, kind: input, shape index: {}]
  %s1 = inlined_call_operand.vmem [shape: bf16[128,128], index: 1, kind: input, shape index: {}]
  %s2 = inlined_call_operand.vmem [shape: f32[1,128], index: 2, kind: input, shape index: {}]
  %s3 = inlined_call_operand.vmem [shape: bf16[128,128], index: 3, kind: input, shape index: {}]
  %s4 = inlined_call_operand.vmem [shape: f32[1,128], index: 4, kind: input, shape index: {}]
  %s5 = inlined_call_operand.hbm [shape: f32[16,128], index: 5, kind: output, shape index: {}]
  %s6 = sld [smem:[#allocation0]]
  $region38: #{feed_forward.1} parent=0
    _
  %s8 = ssub.s32 1, %s6
  %s9 = scalar_select 0, %s8, %s6
  $region1: #{feed_forward.1} parent=0
    #allocation3 [shape = 'u8[8192]{0}', space=vmem, size = 0x2000, scoped, tag = 'output window, operand 0, single buffered']
    #allocation4 [shape = 's32[1]{0}', space=sflag, size = 0x4, scoped, tag = 'scoped memory for feed_forward.1']
    %10 = vsyncpa [#allocation4], 0
    // Predicated region
    $region2: #{feed_forward.1} parent=1 // pred_check
      _
    $region3: #{feed_forward.1} parent=1 // pred_check_branch
      %12 = sbr.rel (0) target = $region5
    $region4: #{feed_forward.1} parent=1 // pred_region
      _
    $region5: #{feed_forward.1} parent=1 // pred_fallthru
      _
    // Predicated region
    $region6: #{feed_forward.1} parent=1 // pred_check
      _
    $region7: #{feed_forward.1} parent=1 // pred_check_branch
      %14 = sbr.rel (0) target = $region9
    $region8: #{feed_forward.1} parent=1 // pred_region
      _
    $region9: #{feed_forward.1} parent=1 // pred_fallthru
      _
    // Predicated region
    $region10: #{feed_forward.1} parent=1 // pred_check
      _
    $region11: #{feed_forward.1} parent=1 // pred_check_branch
      %16 = sbr.rel (0) target = $region13
    $region12: #{feed_forward.1} parent=1 // pred_region
      _
    $region13: #{feed_forward.1} parent=1 // pred_fallthru
      _
    // Predicated region
    $region14: #{feed_forward.1} parent=1 // pred_check
      _
    $region15: #{feed_forward.1} parent=1 // pred_check_branch
      %18 = sbr.rel (0) target = $region17
    $region16: #{feed_forward.1} parent=1 // pred_region
      _
    $region17: #{feed_forward.1} parent=1 // pred_fallthru
      _
    // Predicated region
    $region18: #{feed_forward.1} parent=1 // pred_check
      _
    $region19: #{feed_forward.1} parent=1 // pred_check_branch
      %20 = sbr.rel (0) target = $region21
    $region20: #{feed_forward.1} parent=1 // pred_region
      _
    $region21: #{feed_forward.1} parent=1 // pred_fallthru
      _
    %p22 = scmp.eq.s32.totalorder 0, 0
    // Predicated region
    $region22: #{feed_forward.1} parent=1 // pred_check
      %p23 = pneg %p22
    $region23: #{feed_forward.1} parent=1 // pred_check_branch
      %25 = sbr.rel (%p23) target = $region25
    $region24: #{feed_forward.1} parent=1 // pred_region
      %v26 = vld [vmem:[%s4] sm:$0x1]
      %v28 = vlaneseq
      %v29 = vshrl.u32 %v28, 7
      %v30 = vsub.s32 0, %v29
      %v31 = vrot.slane %v26, %v30
      %33 = vst [vmem:[#allocation2] sm:$0xff] %v31
      %34 = vst [vmem:[#allocation2 + $0x8] sm:$0xff] %v31
    $region25: #{feed_forward.1} parent=1 // pred_fallthru
      _
    %v35 = vld [vmem:[%s0] sm:$0xf]
    %v36 = vld [vmem:[%s0 + $0x4] sm:$0xf]
    %v37 = vld [vmem:[%s1] sm:$0xf]
    %v38 = vld [vmem:[%s1 + $0x4] sm:$0xf]
    %v39 = vld [vmem:[%s1 + $0x8] sm:$0xf]
    %v40 = vld [vmem:[%s1 + $0xc] sm:$0xf]
    %v41 = vld [vmem:[%s1 + $0x10] sm:$0xf]
    %v42 = vld [vmem:[%s1 + $0x14] sm:$0xf]
    %v43 = vld [vmem:[%s1 + $0x18] sm:$0xf]
    %v44 = vld [vmem:[%s1 + $0x1c] sm:$0xf]
    %v45 = vld [vmem:[%s1 + $0x20] sm:$0xf]
    %v46 = vld [vmem:[%s1 + $0x24] sm:$0xf]
    %v47 = vld [vmem:[%s1 + $0x28] sm:$0xf]
    %v48 = vld [vmem:[%s1 + $0x2c] sm:$0xf]
    %v49 = vld [vmem:[%s1 + $0x30] sm:$0xf]
    %v50 = vld [vmem:[%s1 + $0x34] sm:$0xf]
    %v51 = vld [vmem:[%s1 + $0x38] sm:$0xf]
    %v52 = vld [vmem:[%s1 + $0x3c] sm:$0xf]
    %v53 = vld [vmem:[%s2] sm:$0x1]
    %v55 = vlaneseq
    %v56 = vshrl.u32 %v55, 7
    %v57 = vsub.s32 0, %v56
    %v58 = vrot.slane %v53, %v57
    %v62 = vunpack.c.l.b16 %v35
    %v63 = vunpack.c.l.b16 %v36
    %v64 = vpack.c.b16 %v63, %v62
    %v82 = vunpack.c.l.b16 %v37
    %v83 = vunpack.c.l.b16 %v38
    %v84 = vunpack.c.l.b16 %v39
    %v85 = vunpack.c.l.b16 %v40
    %v86 = vunpack.c.l.b16 %v41
    %v87 = vunpack.c.l.b16 %v42
    %v88 = vunpack.c.l.b16 %v43
    %v89 = vunpack.c.l.b16 %v44
    %v90 = vunpack.c.l.b16 %v45
    %v91 = vunpack.c.l.b16 %v46
    %v92 = vunpack.c.l.b16 %v47
    %v93 = vunpack.c.l.b16 %v48
    %v94 = vunpack.c.l.b16 %v49
    %v95 = vunpack.c.l.b16 %v50
    %v96 = vunpack.c.l.b16 %v51
    %v97 = vunpack.c.l.b16 %v52
    %v98 = vpack.c.b16 %v83, %v82
    %v99 = vpack.c.b16 %v85, %v84
    %v100 = vpack.c.b16 %v87, %v86
    %v101 = vpack.c.b16 %v89, %v88
    %v102 = vpack.c.b16 %v91, %v90
    %v103 = vpack.c.b16 %v93, %v92
    %v104 = vpack.c.b16 %v95, %v94
    %v105 = vpack.c.b16 %v97, %v96
    %114 = vmatprep.subr.bf16.mxu0 0
    %115 = vmatpush1.bf16.msra.mxu0 %v105
    %116 = vmatprep.subr.bf16.mxu0 0
    %117 = vmatpush1.bf16.msra.mxu0 %v104
    %118 = vmatprep.subr.bf16.mxu0 0
    %119 = vmatpush1.bf16.msra.mxu0 %v103
    %120 = vmatprep.subr.bf16.mxu0 0
    %121 = vmatpush1.bf16.msra.mxu0 %v102
    %122 = vmatprep.subr.bf16.mxu0 0
    %123 = vmatpush1.bf16.msra.mxu0 %v101
    %124 = vmatprep.subr.bf16.mxu0 0
    %125 = vmatpush1.bf16.msra.mxu0 %v100
    %126 = vmatprep.subr.bf16.mxu0 0
    %127 = vmatpush1.bf16.msra.mxu0 %v99
    %128 = vmatprep.subr.bf16.mxu0 0
    %129 = vmatpush1.bf16.msra.mxu0 %v98
    %130 = vmatprep.subr.bf16.mxu0 0
    %131 = vmatpush2.bf16.msra.mxu0 0
    %132 = vmatprep.subr.bf16.mxu0 0
    %133 = vmatpush2.bf16.msra.mxu0 0
    %134 = vmatprep.subr.bf16.mxu0 0
    %135 = vmatpush2.bf16.msra.mxu0 0
    %136 = vmatprep.subr.bf16.mxu0 0
    %137 = vmatpush2.bf16.msra.mxu0 0
    %138 = vmatprep.subr.bf16.mxu0 0
    %139 = vmatpush2.bf16.msra.mxu0 0
    %140 = vmatprep.subr.bf16.mxu0 0
    %141 = vmatpush2.bf16.msra.mxu0 0
    %142 = vmatprep.subr.bf16.mxu0 0
    %143 = vmatpush2.bf16.msra.mxu0 0
    %144 = vmatprep.subr.bf16.mxu0 0
    %145 = vmatpush2.bf16.msra.mxu0 0
    %146 = vmatprep.mubr.bf16.mxu0 0
    %147 = vmatmul.mubr.bf16.gmra.mxu0 %v64
    %v148 = vpop.f32.mrf.mxu0
    %v149 = vadd.f32 %v58, %v148
    %v150 = vpop.f32.mrf.mxu0
    %v151 = vpop.f32.mrf.mxu0
    %v152 = vadd.f32 %v58, %v151
    %v153 = vpop.f32.mrf.mxu0
    %154 = vdwg.mxu0
    %v155 = vmax.f32 %v149, 0.0
    %v156 = vmax.f32 %v152, 0.0
    %v157 = vmul.f32 %v155, %v155
    %v158 = vmul.f32 %v156, %v156
    %v159 = vld [vmem:[#allocation2] sm:$0xff]
    %v160 = vld [vmem:[#allocation2 + $0x8] sm:$0xff]
    %v161 = vpack.c.bf16 %v158, %v157
    %v162 = vld [vmem:[%s3] sm:$0xf]
    %v163 = vld [vmem:[%s3 + $0x4] sm:$0xf]
    %v164 = vld [vmem:[%s3 + $0x8] sm:$0xf]
    %v165 = vld [vmem:[%s3 + $0xc] sm:$0xf]
    %v166 = vld [vmem:[%s3 + $0x10] sm:$0xf]
    %v167 = vld [vmem:[%s3 + $0x14] sm:$0xf]
    %v168 = vld [vmem:[%s3 + $0x18] sm:$0xf]
    %v169 = vld [vmem:[%s3 + $0x1c] sm:$0xf]
    %v170 = vld [vmem:[%s3 + $0x20] sm:$0xf]
    %v171 = vld [vmem:[%s3 + $0x24] sm:$0xf]
    %v172 = vld [vmem:[%s3 + $0x28] sm:$0xf]
    %v173 = vld [vmem:[%s3 + $0x2c] sm:$0xf]
    %v174 = vld [vmem:[%s3 + $0x30] sm:$0xf]
    %v175 = vld [vmem:[%s3 + $0x34] sm:$0xf]
    %v176 = vld [vmem:[%s3 + $0x38] sm:$0xf]
    %v177 = vld [vmem:[%s3 + $0x3c] sm:$0xf]
    %v194 = vunpack.c.l.b16 %v162
    %v195 = vunpack.c.l.b16 %v163
    %v196 = vunpack.c.l.b16 %v164
    %v197 = vunpack.c.l.b16 %v165
    %v198 = vunpack.c.l.b16 %v166
    %v199 = vunpack.c.l.b16 %v167
    %v200 = vunpack.c.l.b16 %v168
    %v201 = vunpack.c.l.b16 %v169
    %v202 = vunpack.c.l.b16 %v170
    %v203 = vunpack.c.l.b16 %v171
    %v204 = vunpack.c.l.b16 %v172
    %v205 = vunpack.c.l.b16 %v173
    %v206 = vunpack.c.l.b16 %v174
    %v207 = vunpack.c.l.b16 %v175
    %v208 = vunpack.c.l.b16 %v176
    %v209 = vunpack.c.l.b16 %v177
    %v210 = vpack.c.b16 %v195, %v194
    %v211 = vpack.c.b16 %v197, %v196
    %v212 = vpack.c.b16 %v199, %v198
    %v213 = vpack.c.b16 %v201, %v200
    %v214 = vpack.c.b16 %v203, %v202
    %v215 = vpack.c.b16 %v205, %v204
    %v216 = vpack.c.b16 %v207, %v206
    %v217 = vpack.c.b16 %v209, %v208
    %226 = vmatprep.subr.bf16.mxu0 0
    %227 = vmatpush1.bf16.msra.mxu0 %v217
    %228 = vmatprep.subr.bf16.mxu0 0
    %229 = vmatpush1.bf16.msra.mxu0 %v216
    %230 = vmatprep.subr.bf16.mxu0 0
    %231 = vmatpush1.bf16.msra.mxu0 %v215
    %232 = vmatprep.subr.bf16.mxu0 0
    %233 = vmatpush1.bf16.msra.mxu0 %v214
    %234 = vmatprep.subr.bf16.mxu0 0
    %235 = vmatpush1.bf16.msra.mxu0 %v213
    %236 = vmatprep.subr.bf16.mxu0 0
    %237 = vmatpush1.bf16.msra.mxu0 %v212
    %238 = vmatprep.subr.bf16.mxu0 0
    %239 = vmatpush1.bf16.msra.mxu0 %v211
    %240 = vmatprep.subr.bf16.mxu0 0
    %241 = vmatpush1.bf16.msra.mxu0 %v210
    %242 = vmatprep.subr.bf16.mxu0 0
    %243 = vmatpush2.bf16.msra.mxu0 0
    %244 = vmatprep.subr.bf16.mxu0 0
    %245 = vmatpush2.bf16.msra.mxu0 0
    %246 = vmatprep.subr.bf16.mxu0 0
    %247 = vmatpush2.bf16.msra.mxu0 0
    %248 = vmatprep.subr.bf16.mxu0 0
    %249 = vmatpush2.bf16.msra.mxu0 0
    %250 = vmatprep.subr.bf16.mxu0 0
    %251 = vmatpush2.bf16.msra.mxu0 0
    %252 = vmatprep.subr.bf16.mxu0 0
    %253 = vmatpush2.bf16.msra.mxu0 0
    %254 = vmatprep.subr.bf16.mxu0 0
    %255 = vmatpush2.bf16.msra.mxu0 0
    %256 = vmatprep.subr.bf16.mxu0 0
    %257 = vmatpush2.bf16.msra.mxu0 0
    %258 = vmatprep.mubr.bf16.mxu0 0
    %259 = vmatmul.mubr.bf16.gmra.mxu0 %v161
    %v260 = vpop.f32.mrf.mxu0
    %v261 = vadd.f32 0.0, %v260
    %v262 = vpop.f32.mrf.mxu0
    %v263 = vpop.f32.mrf.mxu0
    %v264 = vadd.f32 0.0, %v263
    %v265 = vpop.f32.mrf.mxu0
    %266 = vdwg.mxu0
    %v267 = vadd.f32 %v159, %v261
    %v268 = vadd.f32 %v160, %v264
    %269 = vst [vmem:[#allocation2] sm:$0xff] %v267
    %270 = vst [vmem:[#allocation2 + $0x8] sm:$0xff] %v268
    // Predicated region
    $region26: #{feed_forward.1} parent=1 // pred_check
      %p271 = pneg %p22
    $region27: #{feed_forward.1} parent=1 // pred_check_branch
      %273 = sbr.rel (%p271) target = $region29
    $region28: #{feed_forward.1} parent=1 // pred_region
      %v274 = vld [vmem:[#allocation2] sm:$0xff]
      %v275 = vld [vmem:[#allocation2 + $0x8] sm:$0xff]
      %276 = vst [vmem:[#allocation3] sm:$0xff] %v274
      %277 = vst [vmem:[#allocation3 + $0x8] sm:$0xff] %v275
    $region29: #{feed_forward.1} parent=1 // pred_fallthru
      _
    // Predicated region
    $region30: #{feed_forward.1} parent=1 // pred_check
      _
    $region31: #{feed_forward.1} parent=1 // pred_check_branch
      %279 = sbr.rel (0) target = $region33
    $region32: #{feed_forward.1} parent=1 // pred_region
      %s281 = ssub.s32 256, 256
      %282 = vsyncadd [#allocation4], %s281
      %s283 = sshll.u32 [#allocation3], 4
      %s284 = int_to_ptr.vmem [resolvable:$true] %s283
      %289 = dma.vmem_to_hbm [thread:$0]  %s284, 256, %s5, [#allocation4], 128, 128, 8
    $region33: #{feed_forward.1} parent=1 // pred_fallthru
      _
    // Predicated region
    $region34: #{feed_forward.1} parent=1 // pred_check
      _
    $region35: #{feed_forward.1} parent=1 // pred_check_branch
      %291 = sbr.rel (0) target = $region37
    $region36: #{feed_forward.1} parent=1 // pred_region
      %292 = dma.done [#allocation4], 256
    $region37: #{feed_forward.1} parent=1 // pred_fallthru
      _
    %293 = vsyncpa [#allocation4], 1

</llo_original>
